<compile_context>
chip_gen: v6e
topology: v6e:2x2x1
jax: 0.10.0
libtpu: 0.0.40
codegen_flags: <defaults>
</compile_context>

<pallas_src>
import functools

import jax
import jax.numpy as jnp
from jax import lax
from jax.experimental import pallas as pl
from jax.experimental.pallas import tpu as pltpu

_BN_EPS = 1e-5
_TILE_M = 256          # rows per grid step: multiple of 8 sublanes, feeds MXU well
_VMEM_LIMIT = 32 * 1024 * 1024   # safe on v5e/v6e/v7x; tiles here are tiny


def _conv_stats_kernel(x_ref, w_ref, y_ref, sum_ref, ssq_ref):
    """Pass 1: one row-tile of the im2col GEMM + per-channel sum / sumsq.

    x_ref  : (TILE_M, K)     bf16 im2col patches (K = 9*Cin)
    w_ref  : (K, Cout)       bf16 folded 3x3 conv weights
    y_ref  : (TILE_M, Cout)  f32 conv output tile
    sum_ref: (1, Cout)       f32 per-channel sum   (resident accumulator)
    ssq_ref: (1, Cout)       f32 per-channel sumsq (resident accumulator)
    """
    i = pl.program_id(0)

    # 3x3 conv folded into a single MXU contraction (bf16 in, f32 accumulate).
    y = jnp.dot(x_ref[...], w_ref[...], preferred_element_type=jnp.float32)
    y_ref[...] = y

    # BatchNorm batch statistics accumulated across the ("arbitrary") row axis.
    @pl.when(i == 0)
    def _():
        sum_ref[...] = jnp.zeros_like(sum_ref)
        ssq_ref[...] = jnp.zeros_like(ssq_ref)

    sum_ref[...] += jnp.sum(y, axis=0, keepdims=True)
    ssq_ref[...] += jnp.sum(y * y, axis=0, keepdims=True)


def _bn_relu_kernel(y_ref, scale_ref, shift_ref, o_ref):
    """Pass 2: y * scale + shift (folded BN) then ReLU, one row tile."""
    o_ref[...] = jnp.maximum(
        y_ref[...] * scale_ref[...] + shift_ref[...], 0.0
    ).astype(o_ref.dtype)


@functools.partial(jax.jit, static_argnames=("stride",))
def block_vgg_forward(x_nchw, weight_oihw, gamma, beta, *, stride=1):
    """Equivalent of BlockVGG.forward (PyTorch NCHW in / NCHW out, f32)."""
    N, Cin, H, W = x_nchw.shape
    Cout = weight_oihw.shape[0]
    Ho = (H - 1) // stride + 1        # k=3, pad=1
    Wo = (W - 1) // stride + 1
    K = 9 * Cin

    # ---- wrapper-side layout plumbing: NCHW -> NHWC, pad, im2col ----
    x = jnp.transpose(x_nchw, (0, 2, 3, 1))                   # (N, H, W, Cin)
    xp = jnp.pad(x, ((0, 0), (1, 1), (1, 1), (0, 0)))          # (N, H+2, W+2, Cin)
    taps = []
    for dy in range(3):
        for dx in range(3):
            taps.append(lax.slice(
                xp,
                (0, dy, dx, 0),
                (N, dy + (Ho - 1) * stride + 1, dx + (Wo - 1) * stride + 1, Cin),
                (1, stride, stride, 1)))
    patches = jnp.concatenate(taps, axis=-1)                   # (N, Ho, Wo, 9*Cin)

    M = N * Ho * Wo
    M_pad = _TILE_M * pl.cdiv(M, _TILE_M)
    x2d = patches.reshape(M, K)
    if M_pad != M:
        # Zero rows -> zero conv output (no bias) -> stats are unaffected.
        x2d = jnp.pad(x2d, ((0, M_pad - M), (0, 0)))
    x2d = x2d.astype(jnp.bfloat16)

    # Folded weight: OIHW -> (dy, dx, Cin, Cout) -> (9*Cin, Cout); matches the
    # tap-major / Cin-minor ordering of the patch matrix above.
    w2d = jnp.transpose(weight_oihw, (2, 3, 1, 0)).reshape(K, Cout)
    w2d = w2d.astype(jnp.bfloat16)

    grid = (M_pad // _TILE_M,)

    # ---- pass 1: row-tiled conv GEMM + per-channel sum / sumsq ----
    y2d, csum, cssq = pl.pallas_call(
        _conv_stats_kernel,
        out_shape=(
            jax.ShapeDtypeStruct((M_pad, Cout), jnp.float32),
            jax.ShapeDtypeStruct((1, Cout), jnp.float32),
            jax.ShapeDtypeStruct((1, Cout), jnp.float32),
        ),
        grid=grid,
        in_specs=[
            pl.BlockSpec((_TILE_M, K), lambda i: (i, 0)),
            pl.BlockSpec((K, Cout), lambda i: (0, 0)),
        ],
        out_specs=(
            pl.BlockSpec((_TILE_M, Cout), lambda i: (i, 0)),
            pl.BlockSpec((1, Cout), lambda i: (0, 0)),
            pl.BlockSpec((1, Cout), lambda i: (0, 0)),
        ),
        compiler_params=pltpu.CompilerParams(
            dimension_semantics=("arbitrary",),   # stats accumulate across it
            vmem_limit_bytes=_VMEM_LIMIT,
        ),
    )(x2d, w2d)

    # ---- tiny (Cout,)-sized BN finalize: fold mean/var/gamma/beta ----
    inv_m = 1.0 / float(M)
    mean = csum[0] * inv_m
    var = jnp.maximum(cssq[0] * inv_m - mean * mean, 0.0)   # biased var (training BN)
    inv_std = lax.rsqrt(var + _BN_EPS)
    g = gamma.astype(jnp.float32)
    b = beta.astype(jnp.float32)
    scale = (g * inv_std).reshape(1, Cout)
    shift = (b - mean * g * inv_std).reshape(1, Cout)

    # ---- pass 2: normalize + affine + ReLU (in-place over the conv buffer) ----
    out2d = pl.pallas_call(
        _bn_relu_kernel,
        out_shape=jax.ShapeDtypeStruct((M_pad, Cout), jnp.float32),
        grid=grid,
        in_specs=[
            pl.BlockSpec((_TILE_M, Cout), lambda i: (i, 0)),
            pl.BlockSpec((1, Cout), lambda i: (0, 0)),
            pl.BlockSpec((1, Cout), lambda i: (0, 0)),
        ],
        out_specs=pl.BlockSpec((_TILE_M, Cout), lambda i: (i, 0)),
        input_output_aliases={0: 0},
        compiler_params=pltpu.CompilerParams(
            dimension_semantics=("parallel",),
            vmem_limit_bytes=_VMEM_LIMIT,
        ),
    )(y2d, scale, shift)

    out = out2d[:M].reshape(N, Ho, Wo, Cout)
    return jnp.transpose(out, (0, 3, 1, 2))                   # -> NCHW


def _reference(x_nchw, weight_oihw, gamma, beta, stride=1):
    """Pure-JAX f32 reference of BlockVGG.forward (training-mode BN)."""
    conv = lax.conv_general_dilated(
        x_nchw, weight_oihw, (stride, stride), [(1, 1), (1, 1)],
        dimension_numbers=("NCHW", "OIHW", "NCHW"))
    mean = jnp.mean(conv, axis=(0, 2, 3), keepdims=True)
    var = jnp.mean((conv - mean) ** 2, axis=(0, 2, 3), keepdims=True)
    y = (conv - mean) * lax.rsqrt(var + _BN_EPS)
    y = y * gamma.reshape(1, -1, 1, 1) + beta.reshape(1, -1, 1, 1)
    return jnp.maximum(y, 0.0)


if __name__ == "__main__":
    # Small shapes consistent with the module: N=2, in_planes=4, out_planes=8,
    # spatial=16, stride=1.
    in_planes, out_planes, stride = 4, 8, 1
    key = jax.random.PRNGKey(0)
    kx, kw, kg, kb = jax.random.split(key, 4)

    x = jax.random.normal(kx, (2, in_planes, 16, 16), dtype=jnp.float32)
    conv_w = 0.1 * jax.random.normal(kw, (out_planes, in_planes, 3, 3),
                                     dtype=jnp.float32)
    bn_gamma = 1.0 + 0.1 * jax.random.normal(kg, (out_planes,), dtype=jnp.float32)
    bn_beta = 0.1 * jax.random.normal(kb, (out_planes,), dtype=jnp.float32)

    out = block_vgg_forward(x, conv_w, bn_gamma, bn_beta, stride=stride)
    out = jax.block_until_ready(out)

    ref = _reference(x, conv_w, bn_gamma, bn_beta, stride=stride)
    assert out.shape == ref.shape, (out.shape, ref.shape)
    # Tolerance loosened vs the f32 reference because matmul inputs are bf16
    # (f32 accumulation via preferred_element_type).
    assert jnp.allclose(out, ref, atol=2e-2, rtol=2e-2), "mismatch vs reference"

    print("KERNEL_OK")
</pallas_src>

<mosaic_0001>
module attributes {stable_mosaic.version = 11 : i64} {
  func.func @_conv_stats_kernel(%arg0: i32, %arg1: memref<256x36xbf16, #tpu.memory_space<vmem>>, %arg2: memref<36x8xbf16, #tpu.memory_space<vmem>>, %arg3: memref<256x8xf32, #tpu.memory_space<vmem>>, %arg4: memref<1x8xf32, #tpu.memory_space<vmem>>, %arg5: memref<1x8xf32, #tpu.memory_space<vmem>>) attributes {dimension_semantics = [#tpu.dimension_semantics<arbitrary>], iteration_bounds = array<i64: 2>, scalar_prefetch = 0 : i64, scratch_operands = 0 : i64, tpu.core_type = #tpu.core_type<tc>, window_params = [{transform_indices = @transform_0, window_bounds = array<i64: 256, 36>}, {pipeline_mode = #tpu.pipeline_mode<synchronous>, transform_indices = @transform_1, window_bounds = array<i64: 36, 8>}, {transform_indices = @transform_2, window_bounds = array<i64: 256, 8>}, {pipeline_mode = #tpu.pipeline_mode<synchronous>, transform_indices = @transform_3, window_bounds = array<i64: 1, 8>}, {pipeline_mode = #tpu.pipeline_mode<synchronous>, transform_indices = @transform_4, window_bounds = array<i64: 1, 8>}]} {
    %c0 = arith.constant 0 : index
    %c0_0 = arith.constant 0 : index
    %0 = vector.load %arg1[%c0, %c0_0] : memref<256x36xbf16, #tpu.memory_space<vmem>>, vector<256x36xbf16>
    %c0_1 = arith.constant 0 : index
    %c0_2 = arith.constant 0 : index
    %1 = vector.load %arg2[%c0_1, %c0_2] : memref<36x8xbf16, #tpu.memory_space<vmem>>, vector<36x8xbf16>
    %cst = arith.constant dense<0.000000e+00> : vector<256x8xf32>
    %2 = tpu.matmul %0, %1, %cst {dimension_numbers = #tpu.dot_dimension_numbers<[1], [0], [0], [1], [0, 0, 1, 1], [], []>} : vector<256x36xbf16>, vector<36x8xbf16>, vector<256x8xf32> -> vector<256x8xf32>
    %c0_3 = arith.constant 0 : index
    %c0_4 = arith.constant 0 : index
    %3 = vector.load %arg3[%c0_3, %c0_4] : memref<256x8xf32, #tpu.memory_space<vmem>>, vector<256x8xf32>
    tpu.vector_store %arg3[%c0_3, %c0_4], %2 {strides = array<i32>} : memref<256x8xf32, #tpu.memory_space<vmem>>, vector<256x8xf32>,
    %c0_i32 = arith.constant 0 : i32
    %4 = arith.cmpi eq, %arg0, %c0_i32 : i32
    %5 = arith.extui %4 : i1 to i32
    %c0_i32_5 = arith.constant 0 : i32
    %6 = arith.cmpi ne, %5, %c0_i32_5 : i32
    scf.if %6 {
      %cst_16 = arith.constant 0.000000e+00 : f32
      %18 = vector.broadcast %cst_16 : f32 to vector<1x8xf32>
      %c0_17 = arith.constant 0 : index
      %c0_18 = arith.constant 0 : index
      %19 = vector.load %arg4[%c0_17, %c0_18] : memref<1x8xf32, #tpu.memory_space<vmem>>, vector<1x8xf32>
      tpu.vector_store %arg4[%c0_17, %c0_18], %18 {strides = array<i32>} : memref<1x8xf32, #tpu.memory_space<vmem>>, vector<1x8xf32>,
      %cst_19 = arith.constant 0.000000e+00 : f32
      %20 = vector.broadcast %cst_19 : f32 to vector<1x8xf32>
      %c0_20 = arith.constant 0 : index
      %c0_21 = arith.constant 0 : index
      %21 = vector.load %arg5[%c0_20, %c0_21] : memref<1x8xf32, #tpu.memory_space<vmem>>, vector<1x8xf32>
      tpu.vector_store %arg5[%c0_20, %c0_21], %20 {strides = array<i32>} : memref<1x8xf32, #tpu.memory_space<vmem>>, vector<1x8xf32>,
    } else {
    }
    %c0_6 = arith.constant 0 : index
    %c0_7 = arith.constant 0 : index
    %7 = vector.load %arg4[%c0_6, %c0_7] : memref<1x8xf32, #tpu.memory_space<vmem>>, vector<1x8xf32>
    %cst_8 = arith.constant dense<0.000000e+00> : vector<8xf32>
    %8 = vector.multi_reduction <add>, %2, %cst_8 [0] : vector<256x8xf32> to vector<8xf32>
    %9 = vector.shape_cast %8 : vector<8xf32> to vector<1x8xf32>
    %10 = arith.addf %7, %9 : vector<1x8xf32>
    %c0_9 = arith.constant 0 : index
    %c0_10 = arith.constant 0 : index
    %11 = vector.load %arg4[%c0_9, %c0_10] : memref<1x8xf32, #tpu.memory_space<vmem>>, vector<1x8xf32>
    tpu.vector_store %arg4[%c0_9, %c0_10], %10 {strides = array<i32>} : memref<1x8xf32, #tpu.memory_space<vmem>>, vector<1x8xf32>,
    %c0_11 = arith.constant 0 : index
    %c0_12 = arith.constant 0 : index
    %12 = vector.load %arg5[%c0_11, %c0_12] : memref<1x8xf32, #tpu.memory_space<vmem>>, vector<1x8xf32>
    %13 = arith.mulf %2, %2 : vector<256x8xf32>
    %cst_13 = arith.constant dense<0.000000e+00> : vector<8xf32>
    %14 = vector.multi_reduction <add>, %13, %cst_13 [0] : vector<256x8xf32> to vector<8xf32>
    %15 = vector.shape_cast %14 : vector<8xf32> to vector<1x8xf32>
    %16 = arith.addf %12, %15 : vector<1x8xf32>
    %c0_14 = arith.constant 0 : index
    %c0_15 = arith.constant 0 : index
    %17 = vector.load %arg5[%c0_14, %c0_15] : memref<1x8xf32, #tpu.memory_space<vmem>>, vector<1x8xf32>
    tpu.vector_store %arg5[%c0_14, %c0_15], %16 {strides = array<i32>} : memref<1x8xf32, #tpu.memory_space<vmem>>, vector<1x8xf32>,
    return
  }
  func.func @transform_0(%arg0: i32) -> (i32, i32) {
    %c0_i32 = arith.constant 0 : i32
    %c0_i32_0 = arith.constant 0 : i32
    return %arg0, %c0_i32 : i32, i32
  }
  func.func @transform_1(%arg0: i32) -> (i32, i32) {
    %c0_i32 = arith.constant 0 : i32
    %c0_i32_0 = arith.constant 0 : i32
    %c0_i32_1 = arith.constant 0 : i32
    return %c0_i32, %c0_i32_0 : i32, i32
  }
  func.func @transform_2(%arg0: i32) -> (i32, i32) {
    %c0_i32 = arith.constant 0 : i32
    %c0_i32_0 = arith.constant 0 : i32
    return %arg0, %c0_i32 : i32, i32
  }
  func.func @transform_3(%arg0: i32) -> (i32, i32) {
    %c0_i32 = arith.constant 0 : i32
    %c0_i32_0 = arith.constant 0 : i32
    %c0_i32_1 = arith.constant 0 : i32
    return %c0_i32, %c0_i32_0 : i32, i32
  }
  func.func @transform_4(%arg0: i32) -> (i32, i32) {
    %c0_i32 = arith.constant 0 : i32
    %c0_i32_0 = arith.constant 0 : i32
    %c0_i32_1 = arith.constant 0 : i32
    return %c0_i32, %c0_i32_0 : i32, i32
  }
}

module attributes {stable_mosaic.version = 11 : i64} {
  func.func @_bn_relu_kernel(%arg0: i32, %arg1: memref<256x8xf32, #tpu.memory_space<vmem>>, %arg2: memref<1x8xf32, #tpu.memory_space<vmem>>, %arg3: memref<1x8xf32, #tpu.memory_space<vmem>>, %arg4: memref<256x8xf32, #tpu.memory_space<vmem>>) attributes {dimension_semantics = [#tpu.dimension_semantics<parallel>], iteration_bounds = array<i64: 2>, scalar_prefetch = 0 : i64, scratch_operands = 0 : i64, tpu.core_type = #tpu.core_type<tc>, window_params = [{transform_indices = @transform_0, window_bounds = array<i64: 256, 8>}, {pipeline_mode = #tpu.pipeline_mode<synchronous>, transform_indices = @transform_1, window_bounds = array<i64: 1, 8>}, {pipeline_mode = #tpu.pipeline_mode<synchronous>, transform_indices = @transform_2, window_bounds = array<i64: 1, 8>}, {transform_indices = @transform_3, window_bounds = array<i64: 256, 8>}]} {
    %c0 = arith.constant 0 : index
    %c0_0 = arith.constant 0 : index
    %0 = vector.load %arg1[%c0, %c0_0] : memref<256x8xf32, #tpu.memory_space<vmem>>, vector<256x8xf32>
    %c0_1 = arith.constant 0 : index
    %c0_2 = arith.constant 0 : index
    %1 = vector.load %arg2[%c0_1, %c0_2] : memref<1x8xf32, #tpu.memory_space<vmem>>, vector<1x8xf32>
    %2 = vector.broadcast %1 : vector<1x8xf32> to vector<256x8xf32>
    %3 = arith.mulf %0, %2 : vector<256x8xf32>
    %c0_3 = arith.constant 0 : index
    %c0_4 = arith.constant 0 : index
    %4 = vector.load %arg3[%c0_3, %c0_4] : memref<1x8xf32, #tpu.memory_space<vmem>>, vector<1x8xf32>
    %5 = vector.broadcast %4 : vector<1x8xf32> to vector<256x8xf32>
    %6 = arith.addf %3, %5 : vector<256x8xf32>
    %cst = arith.constant 0.000000e+00 : f32
    %7 = vector.broadcast %cst : f32 to vector<256x8xf32>
    %8 = arith.maximumf %6, %7 : vector<256x8xf32>
    %c0_5 = arith.constant 0 : index
    %c0_6 = arith.constant 0 : index
    %9 = vector.load %arg4[%c0_5, %c0_6] : memref<256x8xf32, #tpu.memory_space<vmem>>, vector<256x8xf32>
    tpu.vector_store %arg4[%c0_5, %c0_6], %8 {strides = array<i32>} : memref<256x8xf32, #tpu.memory_space<vmem>>, vector<256x8xf32>,
    return
  }
  func.func @transform_0(%arg0: i32) -> (i32, i32) {
    %c0_i32 = arith.constant 0 : i32
    %c0_i32_0 = arith.constant 0 : i32
    return %arg0, %c0_i32 : i32, i32
  }
  func.func @transform_1(%arg0: i32) -> (i32, i32) {
    %c0_i32 = arith.constant 0 : i32
    %c0_i32_0 = arith.constant 0 : i32
    %c0_i32_1 = arith.constant 0 : i32
    return %c0_i32, %c0_i32_0 : i32, i32
  }
  func.func @transform_2(%arg0: i32) -> (i32, i32) {
    %c0_i32 = arith.constant 0 : i32
    %c0_i32_0 = arith.constant 0 : i32
    %c0_i32_1 = arith.constant 0 : i32
    return %c0_i32, %c0_i32_0 : i32, i32
  }
  func.func @transform_3(%arg0: i32) -> (i32, i32) {
    %c0_i32 = arith.constant 0 : i32
    %c0_i32_0 = arith.constant 0 : i32
    return %arg0, %c0_i32 : i32, i32
  }
}

</mosaic_0001>

<llo_original>
// kernel: block_vgg_forward.3
$region0: #{block_vgg_forward.3}
  #allocation0 [shape = 'u32[]', space=smem, size = 0x4, offset = 0x4, fixed_abs, tag = 'smem constant byte address 0x4 - core index']
  #allocation1 [shape = 'u32[144,128]{1,0:T(1,128)}', space=vmem, size = 0x12000, scoped, tag = 'internal scratch']
  %s0 = inlined_call_operand.vmem [shape: f32[512,8], index: 0, kind: input, shape index: {}, may-alias: {0,3}]
  %s1 = inlined_call_operand.vmem [shape: f32[1,8], index: 1, kind: input, shape index: {}]
  %s2 = inlined_call_operand.vmem [shape: f32[1,8], index: 2, kind: input, shape index: {}]
  %s3 = inlined_call_operand.vmem [shape: f32[512,8], index: 3, kind: output, shape index: {}, may-alias: {0,3}]
  %s4 = sld [smem:[#allocation0]]
  $region45: #{block_vgg_forward.3} parent=0
    _
  %s6 = ssub.s32 1, %s4
  %s7 = scalar_select 0, %s6, %s4
  loop: start=0, step=1, limit=4
  $region2: #{block_vgg_forward.3} parent=0 // loop_pre_header
    _
  $region3: #{block_vgg_forward.3} parent=0 // loop_header
    %s9 = sphi 0, %s13
    %p10 = scmp.ge.s32.totalorder %s9, 4
    %s19 = sphi 0, %s21
    %s22 = sphi 0, %s19
    %s23 = sphi 0, %s22
    %s39 = sphi 0, %s23
    %s43 = sphi 0, %s43
    %s45 = sphi 0, %s43
    %s46 = sphi 0, %s45
    %s60 = sphi 0, %s46
    %s64 = sphi 0, %s64
    %s66 = sphi 0, %s64
    %s67 = sphi 0, %s66
    %s81 = sphi 0, %s67
    %s87 = sphi 0, %s89
    %s90 = sphi 0, %s87
    %s91 = sphi 0, %s90
    %s107 = sphi 0, %s91
  $region4: #{block_vgg_forward.3} parent=0 // loop_header_branch
    %12 = sbr.rel (%p10) target = $region8
  $region5: #{block_vgg_forward.3} parent=0 // loop_body
    %s14 = ssub.s32 %s9, 1
    %s15 = ssub.s32 %s9, 2
    %s16 = sadd.s32 %s9, 1
    %s17 = ssub.s32 %s9, %s16
    %p18 = scmp.eq.s32.totalorder %s17, 0
    %s20 = sadd.s32 %s19, 1
    %s21 = scalar_select %p18, %s19, %s20
    %p24 = pneg %p18
    %p25 = scmp.eq.s32.totalorder %s9, 1
    %p26 = por %p24, %p25
    %p27 = scmp.ne.s32.totalorder %s19, %s22
    %p28 = scmp.eq.s32.totalorder %s9, 0
    %p29 = por %p27, %p28
    %p30 = scmp.ne.s32.totalorder %s19, %s22
    %p31 = scmp.eq.s32.totalorder %s14, 1
    %p32 = por %p30, %p31
    %p33 = scmp.ne.s32.totalorder %s22, %s23
    %p34 = scmp.eq.s32.totalorder %s14, 0
    %p35 = por %p33, %p34
    %p36 = scmp.ne.s32.totalorder %s22, %s23
    %p37 = scmp.eq.s32.totalorder %s15, 1
    %p38 = por %p36, %p37
    %p40 = scmp.ne.s32.totalorder %s23, %s39
    %p41 = scmp.eq.s32.totalorder %s15, 0
    %p42 = por %p40, %p41
    %s44 = sadd.s32 %s43, 1
    %p47 = scmp.eq.s32.totalorder %s9, 1
    %p48 = scmp.ne.s32.totalorder %s43, %s45
    %p49 = scmp.eq.s32.totalorder %s9, 0
    %p50 = por %p48, %p49
    %p51 = scmp.ne.s32.totalorder %s43, %s45
    %p52 = scmp.eq.s32.totalorder %s14, 1
    %p53 = por %p51, %p52
    %p54 = scmp.ne.s32.totalorder %s45, %s46
    %p55 = scmp.eq.s32.totalorder %s14, 0
    %p56 = por %p54, %p55
    %p57 = scmp.ne.s32.totalorder %s45, %s46
    %p58 = scmp.eq.s32.totalorder %s15, 1
    %p59 = por %p57, %p58
    %p61 = scmp.ne.s32.totalorder %s46, %s60
    %p62 = scmp.eq.s32.totalorder %s15, 0
    %p63 = por %p61, %p62
    %s65 = sadd.s32 %s64, 1
    %p68 = scmp.eq.s32.totalorder %s9, 1
    %p69 = scmp.ne.s32.totalorder %s64, %s66
    %p70 = scmp.eq.s32.totalorder %s9, 0
    %p71 = por %p69, %p70
    %p72 = scmp.ne.s32.totalorder %s64, %s66
    %p73 = scmp.eq.s32.totalorder %s14, 1
    %p74 = por %p72, %p73
    %p75 = scmp.ne.s32.totalorder %s66, %s67
    %p76 = scmp.eq.s32.totalorder %s14, 0
    %p77 = por %p75, %p76
    %p78 = scmp.ne.s32.totalorder %s66, %s67
    %p79 = scmp.eq.s32.totalorder %s15, 1
    %p80 = por %p78, %p79
    %p82 = scmp.ne.s32.totalorder %s67, %s81
    %p83 = scmp.eq.s32.totalorder %s15, 0
    %p84 = por %p82, %p83
    %s85 = ssub.s32 %s9, %s16
    %p86 = scmp.eq.s32.totalorder %s85, 0
    %s88 = sadd.s32 %s87, 1
    %s89 = scalar_select %p86, %s87, %s88
    %p92 = pneg %p86
    %p93 = scmp.eq.s32.totalorder %s9, 1
    %p94 = por %p92, %p93
    %p95 = scmp.ne.s32.totalorder %s87, %s90
    %p96 = scmp.eq.s32.totalorder %s9, 0
    %p97 = por %p95, %p96
    %p98 = scmp.ne.s32.totalorder %s87, %s90
    %p99 = scmp.eq.s32.totalorder %s14, 1
    %p100 = por %p98, %p99
    %p101 = scmp.ne.s32.totalorder %s90, %s91
    %p102 = scmp.eq.s32.totalorder %s14, 0
    %p103 = por %p101, %p102
    %p104 = scmp.ne.s32.totalorder %s90, %s91
    %p105 = scmp.eq.s32.totalorder %s15, 1
    %p106 = por %p104, %p105
    %p108 = scmp.ne.s32.totalorder %s91, %s107
    %p109 = scmp.eq.s32.totalorder %s15, 0
    %p110 = por %p108, %p109
    %p111 = scmp.le.s32.totalorder 1, %s9
    %p112 = scmp.lt.s32.totalorder %s9, 3
    %p113 = pnand %p111, %p112
    %p114 = pneg %p113
    // Predicated region
    $region9: #{block_vgg_forward.3} parent=5 // pred_check
      _
    $region10: #{block_vgg_forward.3} parent=5 // pred_check_branch
      %116 = sbr.rel (%p113) target = $region12
    $region11: #{block_vgg_forward.3} parent=5 // pred_region
      %s117 = ssub.s32 %s9, 1
      // Predicated region
      $region13: #{block_vgg_forward.3} parent=11 // pred_check
        %p118 = pneg %p56
      $region14: #{block_vgg_forward.3} parent=11 // pred_check_branch
        %120 = sbr.rel (%p118) target = $region16
      $region15: #{block_vgg_forward.3} parent=11 // pred_region
        _
      $region16: #{block_vgg_forward.3} parent=11 // pred_fallthru
        _
      // Predicated region
      $region17: #{block_vgg_forward.3} parent=11 // pred_check
        %p121 = pneg %p77
      $region18: #{block_vgg_forward.3} parent=11 // pred_check_branch
        %123 = sbr.rel (%p121) target = $region20
      $region19: #{block_vgg_forward.3} parent=11 // pred_region
        _
      $region20: #{block_vgg_forward.3} parent=11 // pred_fallthru
        _
    $region12: #{block_vgg_forward.3} parent=5 // pred_fallthru
      _
    %p124 = scmp.lt.s32.totalorder %s9, 2
    // Predicated region
    $region21: #{block_vgg_forward.3} parent=5 // pred_check
      %p125 = pneg %p124
    $region22: #{block_vgg_forward.3} parent=5 // pred_check_branch
      %127 = sbr.rel (%p125) target = $region24
    $region23: #{block_vgg_forward.3} parent=5 // pred_region
      // Predicated region
      $region25: #{block_vgg_forward.3} parent=23 // pred_check
        %p128 = pneg %p29
      $region26: #{block_vgg_forward.3} parent=23 // pred_check_branch
        %130 = sbr.rel (%p128) target = $region28
      $region27: #{block_vgg_forward.3} parent=23 // pred_region
        %s131 = smul.u32 32, %s9
        %p132 = scmp.lt.s32.totalorder %s131, 63
        %s133 = scalar_select %p132, %s131, 63
        %s134 = smul.addr %s133, 8
        %s135 = scalar_lea.vmem %s0, %s134
        %s136 = smul.u32 32, %s9
      $region28: #{block_vgg_forward.3} parent=23 // pred_fallthru
        _
    $region24: #{block_vgg_forward.3} parent=5 // pred_fallthru
      _
    %p137 = scmp.le.s32.totalorder 1, %s9
    %p138 = scmp.lt.s32.totalorder %s9, 3
    %p139 = pnand %p137, %p138
    %p140 = pneg %p139
    // Predicated region
    $region29: #{block_vgg_forward.3} parent=5 // pred_check
      _
    $region30: #{block_vgg_forward.3} parent=5 // pred_check_branch
      %142 = sbr.rel (%p139) target = $region32
    $region31: #{block_vgg_forward.3} parent=5 // pred_region
      %s143 = ssub.s32 %s9, 1
      %s144 = smul.u32 32, %s14
      %p145 = scmp.lt.s32.totalorder %s144, 63
      %s146 = scalar_select %p145, %s144, 63
      %s147 = smul.addr %s146, 8
      %s148 = scalar_lea.vmem %s0, %s147
      %p149 = pneg %p35
      %p150 = pneg %p32
      %p151 = pneg %p56
      %p152 = pneg %p53
      %p153 = pneg %p77
      %p154 = pneg %p74
      %p155 = pneg %p103
      %p156 = pneg %p100
      %s157 = smul.u32 32, %s14
      %p158 = scmp.lt.s32.totalorder %s157, 63
      %s159 = scalar_select %p158, %s157, 63
      %s160 = smul.addr %s159, 8
      %s161 = scalar_lea.vmem %s3, %s160
      %s162 = smul.u32 32, %s14
      %p163 = scmp.lt.s32.totalorder %s162, 63
      %s164 = scalar_select %p163, %s162, 63
      %s165 = smul.addr %s164, 8
      %s166 = scalar_lea.vmem %s0, %s165
      %s167 = smul.u32 32, %s14
      %s168 = smul.u32 32, %s14
      %p169 = scmp.lt.s32.totalorder %s168, 63
      %s170 = scalar_select %p169, %s168, 63
      %s171 = smul.addr %s170, 8
      %s172 = scalar_lea.vmem %s3, %s171
      %s173 = smul.u32 32, %s14
      %v174 = vld [vmem:[%s166] sm:$0xff]
      %v175 = vld [vmem:[%s166 + $0x8] sm:$0xff]
      %v176 = vld [vmem:[%s166 + $0x10] sm:$0xff]
      %v177 = vld [vmem:[%s166 + $0x18] sm:$0xff]
      %v178 = vld [vmem:[%s166 + $0x20] sm:$0xff]
      %v179 = vld [vmem:[%s166 + $0x28] sm:$0xff]
      %v180 = vld [vmem:[%s166 + $0x30] sm:$0xff]
      %v181 = vld [vmem:[%s166 + $0x38] sm:$0xff]
      %v182 = vld [vmem:[%s166 + $0x40] sm:$0xff]
      %v183 = vld [vmem:[%s166 + $0x48] sm:$0xff]
      %v184 = vld [vmem:[%s166 + $0x50] sm:$0xff]
      %v185 = vld [vmem:[%s166 + $0x58] sm:$0xff]
      %v186 = vld [vmem:[%s166 + $0x60] sm:$0xff]
      %v187 = vld [vmem:[%s166 + $0x68] sm:$0xff]
      %v188 = vld [vmem:[%s166 + $0x70] sm:$0xff]
      %v189 = vld [vmem:[%s166 + $0x78] sm:$0xff]
      %v190 = vld [vmem:[%s166 + $0x80] sm:$0xff]
      %v191 = vld [vmem:[%s166 + $0x88] sm:$0xff]
      %v192 = vld [vmem:[%s166 + $0x90] sm:$0xff]
      %v193 = vld [vmem:[%s166 + $0x98] sm:$0xff]
      %v194 = vld [vmem:[%s166 + $0xa0] sm:$0xff]
      %v195 = vld [vmem:[%s166 + $0xa8] sm:$0xff]
      %v196 = vld [vmem:[%s166 + $0xb0] sm:$0xff]
      %v197 = vld [vmem:[%s166 + $0xb8] sm:$0xff]
      %v198 = vld [vmem:[%s166 + $0xc0] sm:$0xff]
      %v199 = vld [vmem:[%s166 + $0xc8] sm:$0xff]
      %v200 = vld [vmem:[%s166 + $0xd0] sm:$0xff]
      %v201 = vld [vmem:[%s166 + $0xd8] sm:$0xff]
      %v202 = vld [vmem:[%s166 + $0xe0] sm:$0xff]
      %v203 = vld [vmem:[%s166 + $0xe8] sm:$0xff]
      %v204 = vld [vmem:[%s166 + $0xf0] sm:$0xff]
      %v205 = vld [vmem:[%s166 + $0xf8] sm:$0xff]
      %v206 = vld [vmem:[%s1] sm:$0x1]
      %v208 = vlaneseq
      %v209 = vshrl.u32 %v208, 7
      %v210 = vsub.s32 0, %v209
      %v211 = vrot.slane %v206, %v210
      %v213 = vmul.f32 %v174, %v211
      %v214 = vmul.f32 %v175, %v211
      %v215 = vmul.f32 %v176, %v211
      %v216 = vmul.f32 %v177, %v211
      %v217 = vmul.f32 %v178, %v211
      %v218 = vmul.f32 %v179, %v211
      %v219 = vmul.f32 %v180, %v211
      %v220 = vmul.f32 %v181, %v211
      %v221 = vmul.f32 %v182, %v211
      %v222 = vmul.f32 %v183, %v211
      %v223 = vmul.f32 %v184, %v211
      %v224 = vmul.f32 %v185, %v211
      %v225 = vmul.f32 %v186, %v211
      %v226 = vmul.f32 %v187, %v211
      %v227 = vmul.f32 %v188, %v211
      %v228 = vmul.f32 %v189, %v211
      %v229 = vmul.f32 %v190, %v211
      %v230 = vmul.f32 %v191, %v211
      %v231 = vmul.f32 %v192, %v211
      %v232 = vmul.f32 %v193, %v211
      %v233 = vmul.f32 %v194, %v211
      %v234 = vmul.f32 %v195, %v211
      %v235 = vmul.f32 %v196, %v211
      %v236 = vmul.f32 %v197, %v211
      %v237 = vmul.f32 %v198, %v211
      %v238 = vmul.f32 %v199, %v211
      %v239 = vmul.f32 %v200, %v211
      %v240 = vmul.f32 %v201, %v211
      %v241 = vmul.f32 %v202, %v211
      %v242 = vmul.f32 %v203, %v211
      %v243 = vmul.f32 %v204, %v211
      %v244 = vmul.f32 %v205, %v211
      %v245 = vld [vmem:[%s2] sm:$0x1]
      %v247 = vlaneseq
      %v248 = vshrl.u32 %v247, 7
      %v249 = vsub.s32 0, %v248
      %v250 = vrot.slane %v245, %v249
      %v252 = vadd.f32 %v213, %v250
      %v253 = vadd.f32 %v214, %v250
      %v254 = vadd.f32 %v215, %v250
      %v255 = vadd.f32 %v216, %v250
      %v256 = vadd.f32 %v217, %v250
      %v257 = vadd.f32 %v218, %v250
      %v258 = vadd.f32 %v219, %v250
      %v259 = vadd.f32 %v220, %v250
      %v260 = vadd.f32 %v221, %v250
      %v261 = vadd.f32 %v222, %v250
      %v262 = vadd.f32 %v223, %v250
      %v263 = vadd.f32 %v224, %v250
      %v264 = vadd.f32 %v225, %v250
      %v265 = vadd.f32 %v226, %v250
      %v266 = vadd.f32 %v227, %v250
      %v267 = vadd.f32 %v228, %v250
      %v268 = vadd.f32 %v229, %v250
      %v269 = vadd.f32 %v230, %v250
      %v270 = vadd.f32 %v231, %v250
      %v271 = vadd.f32 %v232, %v250
      %v272 = vadd.f32 %v233, %v250
      %v273 = vadd.f32 %v234, %v250
      %v274 = vadd.f32 %v235, %v250
      %v275 = vadd.f32 %v236, %v250
      %v276 = vadd.f32 %v237, %v250
      %v277 = vadd.f32 %v238, %v250
      %v278 = vadd.f32 %v239, %v250
      %v279 = vadd.f32 %v240, %v250
      %v280 = vadd.f32 %v241, %v250
      %v281 = vadd.f32 %v242, %v250
      %v282 = vadd.f32 %v243, %v250
      %v283 = vadd.f32 %v244, %v250
      %v284 = vmax.f32 %v252, 0.0
      %v285 = vmax.f32 %v253, 0.0
      %v286 = vmax.f32 %v254, 0.0
      %v287 = vmax.f32 %v255, 0.0
      %v288 = vmax.f32 %v256, 0.0
      %v289 = vmax.f32 %v257, 0.0
      %v290 = vmax.f32 %v258, 0.0
      %v291 = vmax.f32 %v259, 0.0
      %v292 = vmax.f32 %v260, 0.0
      %v293 = vmax.f32 %v261, 0.0
      %v294 = vmax.f32 %v262, 0.0
      %v295 = vmax.f32 %v263, 0.0
      %v296 = vmax.f32 %v264, 0.0
      %v297 = vmax.f32 %v265, 0.0
      %v298 = vmax.f32 %v266, 0.0
      %v299 = vmax.f32 %v267, 0.0
      %v300 = vmax.f32 %v268, 0.0
      %v301 = vmax.f32 %v269, 0.0
      %v302 = vmax.f32 %v270, 0.0
      %v303 = vmax.f32 %v271, 0.0
      %v304 = vmax.f32 %v272, 0.0
      %v305 = vmax.f32 %v273, 0.0
      %v306 = vmax.f32 %v274, 0.0
      %v307 = vmax.f32 %v275, 0.0
      %v308 = vmax.f32 %v276, 0.0
      %v309 = vmax.f32 %v277, 0.0
      %v310 = vmax.f32 %v278, 0.0
      %v311 = vmax.f32 %v279, 0.0
      %v312 = vmax.f32 %v280, 0.0
      %v313 = vmax.f32 %v281, 0.0
      %v314 = vmax.f32 %v282, 0.0
      %v315 = vmax.f32 %v283, 0.0
      %vm316 = vcmask 64512
      %317 = vst.msk [vmem:[%s172] sm:$0xff] %vm316, %v284
      %318 = vst.msk [vmem:[%s172 + $0x8] sm:$0xff] %vm316, %v285
      %319 = vst.msk [vmem:[%s172 + $0x10] sm:$0xff] %vm316, %v286
      %320 = vst.msk [vmem:[%s172 + $0x18] sm:$0xff] %vm316, %v287
      %321 = vst.msk [vmem:[%s172 + $0x20] sm:$0xff] %vm316, %v288
      %322 = vst.msk [vmem:[%s172 + $0x28] sm:$0xff] %vm316, %v289
      %323 = vst.msk [vmem:[%s172 + $0x30] sm:$0xff] %vm316, %v290
      %324 = vst.msk [vmem:[%s172 + $0x38] sm:$0xff] %vm316, %v291
      %325 = vst.msk [vmem:[%s172 + $0x40] sm:$0xff] %vm316, %v292
      %326 = vst.msk [vmem:[%s172 + $0x48] sm:$0xff] %vm316, %v293
      %327 = vst.msk [vmem:[%s172 + $0x50] sm:$0xff] %vm316, %v294
      %328 = vst.msk [vmem:[%s172 + $0x58] sm:$0xff] %vm316, %v295
      %329 = vst.msk [vmem:[%s172 + $0x60] sm:$0xff] %vm316, %v296
      %330 = vst.msk [vmem:[%s172 + $0x68] sm:$0xff] %vm316, %v297
      %331 = vst.msk [vmem:[%s172 + $0x70] sm:$0xff] %vm316, %v298
      %332 = vst.msk [vmem:[%s172 + $0x78] sm:$0xff] %vm316, %v299
      %333 = vst.msk [vmem:[%s172 + $0x80] sm:$0xff] %vm316, %v300
      %334 = vst.msk [vmem:[%s172 + $0x88] sm:$0xff] %vm316, %v301
      %335 = vst.msk [vmem:[%s172 + $0x90] sm:$0xff] %vm316, %v302
      %336 = vst.msk [vmem:[%s172 + $0x98] sm:$0xff] %vm316, %v303
      %337 = vst.msk [vmem:[%s172 + $0xa0] sm:$0xff] %vm316, %v304
      %338 = vst.msk [vmem:[%s172 + $0xa8] sm:$0xff] %vm316, %v305
      %339 = vst.msk [vmem:[%s172 + $0xb0] sm:$0xff] %vm316, %v306
      %340 = vst.msk [vmem:[%s172 + $0xb8] sm:$0xff] %vm316, %v307
      %341 = vst.msk [vmem:[%s172 + $0xc0] sm:$0xff] %vm316, %v308
      %342 = vst.msk [vmem:[%s172 + $0xc8] sm:$0xff] %vm316, %v309
      %343 = vst.msk [vmem:[%s172 + $0xd0] sm:$0xff] %vm316, %v310
      %344 = vst.msk [vmem:[%s172 + $0xd8] sm:$0xff] %vm316, %v311
      %345 = vst.msk [vmem:[%s172 + $0xe0] sm:$0xff] %vm316, %v312
      %346 = vst.msk [vmem:[%s172 + $0xe8] sm:$0xff] %vm316, %v313
      %347 = vst.msk [vmem:[%s172 + $0xf0] sm:$0xff] %vm316, %v314
      %348 = vst.msk [vmem:[%s172 + $0xf8] sm:$0xff] %vm316, %v315
      %s349 = smul.u32 32, %s14
      %p350 = scmp.lt.s32.totalorder %s349, 63
      %s351 = scalar_select %p350, %s349, 63
      %s352 = smul.addr %s351, 8
      %s353 = scalar_lea.vmem %s3, %s352
      // Predicated region
      $region33: #{block_vgg_forward.3} parent=31 // pred_check
        %p354 = pneg %p100
      $region34: #{block_vgg_forward.3} parent=31 // pred_check_branch
        %356 = sbr.rel (%p354) target = $region36
      $region35: #{block_vgg_forward.3} parent=31 // pred_region
        %s357 = smul.u32 32, %s14
      $region36: #{block_vgg_forward.3} parent=31 // pred_fallthru
        _
    $region32: #{block_vgg_forward.3} parent=5 // pred_fallthru
      _
    %p358 = scmp.le.s32.totalorder 2, %s9
    // Predicated region
    $region37: #{block_vgg_forward.3} parent=5 // pred_check
      %p359 = pneg %p358
    $region38: #{block_vgg_forward.3} parent=5 // pred_check_branch
      %361 = sbr.rel (%p359) target = $region40
    $region39: #{block_vgg_forward.3} parent=5 // pred_region
      %s362 = ssub.s32 %s9, 2
      // Predicated region
      $region41: #{block_vgg_forward.3} parent=39 // pred_check
        %p363 = pneg %p106
      $region42: #{block_vgg_forward.3} parent=39 // pred_check_branch
        %365 = sbr.rel (%p363) target = $region44
      $region43: #{block_vgg_forward.3} parent=39 // pred_region
        %s366 = smul.u32 32, %s15
        %p367 = scmp.lt.s32.totalorder %s366, 63
        %s368 = scalar_select %p367, %s366, 63
        %s369 = smul.addr %s368, 8
        %s370 = scalar_lea.vmem %s3, %s369
      $region44: #{block_vgg_forward.3} parent=39 // pred_fallthru
        _
    $region40: #{block_vgg_forward.3} parent=5 // pred_fallthru
      _
  $region6: #{block_vgg_forward.3} parent=0 // loop_footer
    %s13 = sadd.s32 1, %s9
  $region7: #{block_vgg_forward.3} parent=0 // loop_footer_branch
    %8 = sbr.rel target = $region3
  $region8: #{block_vgg_forward.3} parent=0 // loop_exit
    _

// kernel: block_vgg_forward.2
$region0: #{block_vgg_forward.2}
  #allocation0 [shape = 'u32[]', space=smem, size = 0x4, offset = 0x4, fixed_abs, tag = 'smem constant byte address 0x4 - core index']
  #allocation1 [shape = 'u32[144,128]{1,0:T(1,128)}', space=vmem, size = 0x12000, scoped, tag = 'internal scratch']
  %s0 = inlined_call_operand.vmem [shape: bf16[512,36], index: 0, kind: input, shape index: {}]
  %s1 = inlined_call_operand.vmem [shape: bf16[36,8], index: 1, kind: input, shape index: {}]
  %s2 = inlined_call_operand.vmem [shape: f32[512,8], index: 2, kind: output, shape index: {0}]
  %s3 = inlined_call_operand.vmem [shape: f32[1,8], index: 3, kind: output, shape index: {1}]
  %s4 = inlined_call_operand.vmem [shape: f32[1,8], index: 4, kind: output, shape index: {2}]
  %5 = xla_tuple %s2, %s3, %s4
  %s6 = sld [smem:[#allocation0]]
  $region61: #{block_vgg_forward.2} parent=0
    _
  %s8 = ssub.s32 1, %s6
  %s9 = scalar_select 0, %s8, %s6
  loop: start=0, step=1, limit=4
  $region2: #{block_vgg_forward.2} parent=0 // loop_pre_header
    _
  $region3: #{block_vgg_forward.2} parent=0 // loop_header
    %s11 = sphi 0, %s15
    %p12 = scmp.ge.s32.totalorder %s11, 4
    %s21 = sphi 0, %s23
    %s24 = sphi 0, %s21
    %s25 = sphi 0, %s24
    %s41 = sphi 0, %s25
    %s45 = sphi 0, %s45
    %s47 = sphi 0, %s45
    %s48 = sphi 0, %s47
    %s62 = sphi 0, %s48
    %s68 = sphi 0, %s70
    %s71 = sphi 0, %s68
    %s72 = sphi 0, %s71
    %s88 = sphi 0, %s72
    %s92 = sphi 0, %s92
    %s94 = sphi 0, %s92
    %s95 = sphi 0, %s94
    %s109 = sphi 0, %s95
    %s113 = sphi 0, %s113
    %s115 = sphi 0, %s113
    %s116 = sphi 0, %s115
    %s130 = sphi 0, %s116
  $region4: #{block_vgg_forward.2} parent=0 // loop_header_branch
    %14 = sbr.rel (%p12) target = $region8
  $region5: #{block_vgg_forward.2} parent=0 // loop_body
    %s16 = ssub.s32 %s11, 1
    %s17 = ssub.s32 %s11, 2
    %s18 = sadd.s32 %s11, 1
    %s19 = ssub.s32 %s11, %s18
    %p20 = scmp.eq.s32.totalorder %s19, 0
    %s22 = sadd.s32 %s21, 1
    %s23 = scalar_select %p20, %s21, %s22
    %p26 = pneg %p20
    %p27 = scmp.eq.s32.totalorder %s11, 1
    %p28 = por %p26, %p27
    %p29 = scmp.ne.s32.totalorder %s21, %s24
    %p30 = scmp.eq.s32.totalorder %s11, 0
    %p31 = por %p29, %p30
    %p32 = scmp.ne.s32.totalorder %s21, %s24
    %p33 = scmp.eq.s32.totalorder %s16, 1
    %p34 = por %p32, %p33
    %p35 = scmp.ne.s32.totalorder %s24, %s25
    %p36 = scmp.eq.s32.totalorder %s16, 0
    %p37 = por %p35, %p36
    %p38 = scmp.ne.s32.totalorder %s24, %s25
    %p39 = scmp.eq.s32.totalorder %s17, 1
    %p40 = por %p38, %p39
    %p42 = scmp.ne.s32.totalorder %s25, %s41
    %p43 = scmp.eq.s32.totalorder %s17, 0
    %p44 = por %p42, %p43
    %s46 = sadd.s32 %s45, 1
    %p49 = scmp.eq.s32.totalorder %s11, 1
    %p50 = scmp.ne.s32.totalorder %s45, %s47
    %p51 = scmp.eq.s32.totalorder %s11, 0
    %p52 = por %p50, %p51
    %p53 = scmp.ne.s32.totalorder %s45, %s47
    %p54 = scmp.eq.s32.totalorder %s16, 1
    %p55 = por %p53, %p54
    %p56 = scmp.ne.s32.totalorder %s47, %s48
    %p57 = scmp.eq.s32.totalorder %s16, 0
    %p58 = por %p56, %p57
    %p59 = scmp.ne.s32.totalorder %s47, %s48
    %p60 = scmp.eq.s32.totalorder %s17, 1
    %p61 = por %p59, %p60
    %p63 = scmp.ne.s32.totalorder %s48, %s62
    %p64 = scmp.eq.s32.totalorder %s17, 0
    %p65 = por %p63, %p64
    %s66 = ssub.s32 %s11, %s18
    %p67 = scmp.eq.s32.totalorder %s66, 0
    %s69 = sadd.s32 %s68, 1
    %s70 = scalar_select %p67, %s68, %s69
    %p73 = pneg %p67
    %p74 = scmp.eq.s32.totalorder %s11, 1
    %p75 = por %p73, %p74
    %p76 = scmp.ne.s32.totalorder %s68, %s71
    %p77 = scmp.eq.s32.totalorder %s11, 0
    %p78 = por %p76, %p77
    %p79 = scmp.ne.s32.totalorder %s68, %s71
    %p80 = scmp.eq.s32.totalorder %s16, 1
    %p81 = por %p79, %p80
    %p82 = scmp.ne.s32.totalorder %s71, %s72
    %p83 = scmp.eq.s32.totalorder %s16, 0
    %p84 = por %p82, %p83
    %p85 = scmp.ne.s32.totalorder %s71, %s72
    %p86 = scmp.eq.s32.totalorder %s17, 1
    %p87 = por %p85, %p86
    %p89 = scmp.ne.s32.totalorder %s72, %s88
    %p90 = scmp.eq.s32.totalorder %s17, 0
    %p91 = por %p89, %p90
    %s93 = sadd.s32 %s92, 1
    %p96 = scmp.eq.s32.totalorder %s11, 1
    %p97 = scmp.ne.s32.totalorder %s92, %s94
    %p98 = scmp.eq.s32.totalorder %s11, 0
    %p99 = por %p97, %p98
    %p100 = scmp.ne.s32.totalorder %s92, %s94
    %p101 = scmp.eq.s32.totalorder %s16, 1
    %p102 = por %p100, %p101
    %p103 = scmp.ne.s32.totalorder %s94, %s95
    %p104 = scmp.eq.s32.totalorder %s16, 0
    %p105 = por %p103, %p104
    %p106 = scmp.ne.s32.totalorder %s94, %s95
    %p107 = scmp.eq.s32.totalorder %s17, 1
    %p108 = por %p106, %p107
    %p110 = scmp.ne.s32.totalorder %s95, %s109
    %p111 = scmp.eq.s32.totalorder %s17, 0
    %p112 = por %p110, %p111
    %s114 = sadd.s32 %s113, 1
    %p117 = scmp.eq.s32.totalorder %s11, 1
    %p118 = scmp.ne.s32.totalorder %s113, %s115
    %p119 = scmp.eq.s32.totalorder %s11, 0
    %p120 = por %p118, %p119
    %p121 = scmp.ne.s32.totalorder %s113, %s115
    %p122 = scmp.eq.s32.totalorder %s16, 1
    %p123 = por %p121, %p122
    %p124 = scmp.ne.s32.totalorder %s115, %s116
    %p125 = scmp.eq.s32.totalorder %s16, 0
    %p126 = por %p124, %p125
    %p127 = scmp.ne.s32.totalorder %s115, %s116
    %p128 = scmp.eq.s32.totalorder %s17, 1
    %p129 = por %p127, %p128
    %p131 = scmp.ne.s32.totalorder %s116, %s130
    %p132 = scmp.eq.s32.totalorder %s17, 0
    %p133 = por %p131, %p132
    %p134 = scmp.le.s32.totalorder 1, %s11
    %p135 = scmp.lt.s32.totalorder %s11, 3
    %p136 = pnand %p134, %p135
    %p137 = pneg %p136
    // Predicated region
    $region9: #{block_vgg_forward.2} parent=5 // pred_check
      _
    $region10: #{block_vgg_forward.2} parent=5 // pred_check_branch
      %139 = sbr.rel (%p136) target = $region12
    $region11: #{block_vgg_forward.2} parent=5 // pred_region
      %s140 = ssub.s32 %s11, 1
      // Predicated region
      $region13: #{block_vgg_forward.2} parent=11 // pred_check
        %p141 = pneg %p58
      $region14: #{block_vgg_forward.2} parent=11 // pred_check_branch
        %143 = sbr.rel (%p141) target = $region16
      $region15: #{block_vgg_forward.2} parent=11 // pred_region
        _
      $region16: #{block_vgg_forward.2} parent=11 // pred_fallthru
        _
    $region12: #{block_vgg_forward.2} parent=5 // pred_fallthru
      _
    %p144 = scmp.lt.s32.totalorder %s11, 2
    // Predicated region
    $region17: #{block_vgg_forward.2} parent=5 // pred_check
      %p145 = pneg %p144
    $region18: #{block_vgg_forward.2} parent=5 // pred_check_branch
      %147 = sbr.rel (%p145) target = $region20
    $region19: #{block_vgg_forward.2} parent=5 // pred_region
      // Predicated region
      $region21: #{block_vgg_forward.2} parent=19 // pred_check
        %p148 = pneg %p31
      $region22: #{block_vgg_forward.2} parent=19 // pred_check_branch
        %150 = sbr.rel (%p148) target = $region24
      $region23: #{block_vgg_forward.2} parent=19 // pred_region
        %s151 = smul.u32 32, %s11
        %p152 = scmp.lt.s32.totalorder %s151, 63
        %s153 = scalar_select %p152, %s151, 63
        %s154 = smul.addr %s153, 4
        %s155 = scalar_lea.vmem %s0, %s154
        %s156 = smul.u32 32, %s11
      $region24: #{block_vgg_forward.2} parent=19 // pred_fallthru
        _
    $region20: #{block_vgg_forward.2} parent=5 // pred_fallthru
      _
    %p157 = scmp.le.s32.totalorder 1, %s11
    %p158 = scmp.lt.s32.totalorder %s11, 3
    %p159 = pnand %p157, %p158
    %p160 = pneg %p159
    // Predicated region
    $region25: #{block_vgg_forward.2} parent=5 // pred_check
      _
    $region26: #{block_vgg_forward.2} parent=5 // pred_check_branch
      %162 = sbr.rel (%p159) target = $region28
    $region27: #{block_vgg_forward.2} parent=5 // pred_region
      %s163 = ssub.s32 %s11, 1
      %s164 = smul.u32 32, %s16
      %p165 = scmp.lt.s32.totalorder %s164, 63
      %s166 = scalar_select %p165, %s164, 63
      %s167 = smul.addr %s166, 4
      %s168 = scalar_lea.vmem %s0, %s167
      %p169 = pneg %p37
      %p170 = pneg %p34
      %p171 = pneg %p58
      %p172 = pneg %p55
      %p173 = pneg %p84
      %p174 = pneg %p81
      %s175 = smul.u32 32, %s16
      %p176 = scmp.lt.s32.totalorder %s175, 63
      %s177 = scalar_select %p176, %s175, 63
      %s178 = smul.addr %s177, 8
      %s179 = scalar_lea.vmem %s2, %s178
      %p180 = pneg %p105
      %p181 = pneg %p102
      %p182 = pneg %p126
      %p183 = pneg %p123
      %s184 = smul.u32 32, %s16
      %p185 = scmp.lt.s32.totalorder %s184, 63
      %s186 = scalar_select %p185, %s184, 63
      %s187 = smul.addr %s186, 4
      %s188 = scalar_lea.vmem %s0, %s187
      %s189 = smul.u32 32, %s16
      %s190 = smul.u32 32, %s16
      %p191 = scmp.lt.s32.totalorder %s190, 63
      %s192 = scalar_select %p191, %s190, 63
      %s193 = smul.addr %s192, 8
      %s194 = scalar_lea.vmem %s2, %s193
      %s195 = smul.u32 32, %s16
      %v197 = vld [vmem:[%s188] sm:$0xf]
      %v198 = vld [vmem:[%s188 + $0x4] sm:$0xf]
      %v199 = vld [vmem:[%s188 + $0x8] sm:$0xf]
      %v200 = vld [vmem:[%s188 + $0xc] sm:$0xf]
      %v201 = vld [vmem:[%s188 + $0x10] sm:$0xf]
      %v202 = vld [vmem:[%s188 + $0x14] sm:$0xf]
      %v203 = vld [vmem:[%s188 + $0x18] sm:$0xf]
      %v204 = vld [vmem:[%s188 + $0x1c] sm:$0xf]
      %v205 = vld [vmem:[%s188 + $0x20] sm:$0xf]
      %v206 = vld [vmem:[%s188 + $0x24] sm:$0xf]
      %v207 = vld [vmem:[%s188 + $0x28] sm:$0xf]
      %v208 = vld [vmem:[%s188 + $0x2c] sm:$0xf]
      %v209 = vld [vmem:[%s188 + $0x30] sm:$0xf]
      %v210 = vld [vmem:[%s188 + $0x34] sm:$0xf]
      %v211 = vld [vmem:[%s188 + $0x38] sm:$0xf]
      %v212 = vld [vmem:[%s188 + $0x3c] sm:$0xf]
      %v213 = vld [vmem:[%s188 + $0x40] sm:$0xf]
      %v214 = vld [vmem:[%s188 + $0x44] sm:$0xf]
      %v215 = vld [vmem:[%s188 + $0x48] sm:$0xf]
      %v216 = vld [vmem:[%s188 + $0x4c] sm:$0xf]
      %v217 = vld [vmem:[%s188 + $0x50] sm:$0xf]
      %v218 = vld [vmem:[%s188 + $0x54] sm:$0xf]
      %v219 = vld [vmem:[%s188 + $0x58] sm:$0xf]
      %v220 = vld [vmem:[%s188 + $0x5c] sm:$0xf]
      %v221 = vld [vmem:[%s188 + $0x60] sm:$0xf]
      %v222 = vld [vmem:[%s188 + $0x64] sm:$0xf]
      %v223 = vld [vmem:[%s188 + $0x68] sm:$0xf]
      %v224 = vld [vmem:[%s188 + $0x6c] sm:$0xf]
      %v225 = vld [vmem:[%s188 + $0x70] sm:$0xf]
      %v226 = vld [vmem:[%s188 + $0x74] sm:$0xf]
      %v227 = vld [vmem:[%s188 + $0x78] sm:$0xf]
      %v228 = vld [vmem:[%s188 + $0x7c] sm:$0xf]
      %v229 = vld [vmem:[%s1] sm:$0xf]
      %v230 = vld [vmem:[%s1 + $0x4] sm:$0xf]
      %v231 = vld [vmem:[%s1 + $0x8] sm:$0xf]
      %v232 = vld [vmem:[%s1 + $0xc] sm:$0xf]
      %v233 = vld [vmem:[%s1 + $0x10] sm:$0x3]
      %v266 = vunpack.c.l.b16 %v197
      %v267 = vunpack.c.l.b16 %v198
      %v268 = vunpack.c.l.b16 %v199
      %v269 = vunpack.c.l.b16 %v200
      %v270 = vunpack.c.l.b16 %v201
      %v271 = vunpack.c.l.b16 %v202
      %v272 = vunpack.c.l.b16 %v203
      %v273 = vunpack.c.l.b16 %v204
      %v274 = vunpack.c.l.b16 %v205
      %v275 = vunpack.c.l.b16 %v206
      %v276 = vunpack.c.l.b16 %v207
      %v277 = vunpack.c.l.b16 %v208
      %v278 = vunpack.c.l.b16 %v209
      %v279 = vunpack.c.l.b16 %v210
      %v280 = vunpack.c.l.b16 %v211
      %v281 = vunpack.c.l.b16 %v212
      %v282 = vunpack.c.l.b16 %v213
      %v283 = vunpack.c.l.b16 %v214
      %v284 = vunpack.c.l.b16 %v215
      %v285 = vunpack.c.l.b16 %v216
      %v286 = vunpack.c.l.b16 %v217
      %v287 = vunpack.c.l.b16 %v218
      %v288 = vunpack.c.l.b16 %v219
      %v289 = vunpack.c.l.b16 %v220
      %v290 = vunpack.c.l.b16 %v221
      %v291 = vunpack.c.l.b16 %v222
      %v292 = vunpack.c.l.b16 %v223
      %v293 = vunpack.c.l.b16 %v224
      %v294 = vunpack.c.l.b16 %v225
      %v295 = vunpack.c.l.b16 %v226
      %v296 = vunpack.c.l.b16 %v227
      %v297 = vunpack.c.l.b16 %v228
      %v298 = vpack.c.b16 %v267, %v266
      %v299 = vpack.c.b16 %v269, %v268
      %v300 = vpack.c.b16 %v271, %v270
      %v301 = vpack.c.b16 %v273, %v272
      %v302 = vpack.c.b16 %v275, %v274
      %v303 = vpack.c.b16 %v277, %v276
      %v304 = vpack.c.b16 %v279, %v278
      %v305 = vpack.c.b16 %v281, %v280
      %v306 = vpack.c.b16 %v283, %v282
      %v307 = vpack.c.b16 %v285, %v284
      %v308 = vpack.c.b16 %v287, %v286
      %v309 = vpack.c.b16 %v289, %v288
      %v310 = vpack.c.b16 %v291, %v290
      %v311 = vpack.c.b16 %v293, %v292
      %v312 = vpack.c.b16 %v295, %v294
      %v313 = vpack.c.b16 %v297, %v296
      %v319 = vunpack.c.l.b16 %v229
      %v320 = vunpack.c.l.b16 %v230
      %v321 = vunpack.c.l.b16 %v231
      %v322 = vunpack.c.l.b16 %v232
      %v323 = vunpack.c.l.b16 %v233
      %v324 = vpack.c.b16 %v320, %v319
      %v325 = vpack.c.b16 %v322, %v321
      %v326 = vpack.c.b16 %v323, %v323
      %vm329 = vcmask 293888
      %v331 = vsel %vm329, %v298, 0
      %v334 = vsel %vm329, %v299, 0
      %v337 = vsel %vm329, %v300, 0
      %v340 = vsel %vm329, %v301, 0
      %v343 = vsel %vm329, %v302, 0
      %v346 = vsel %vm329, %v303, 0
      %v349 = vsel %vm329, %v304, 0
      %v352 = vsel %vm329, %v305, 0
      %v355 = vsel %vm329, %v306, 0
      %v358 = vsel %vm329, %v307, 0
      %v361 = vsel %vm329, %v308, 0
      %v364 = vsel %vm329, %v309, 0
      %v367 = vsel %vm329, %v310, 0
      %v370 = vsel %vm329, %v311, 0
      %v373 = vsel %vm329, %v312, 0
      %v376 = vsel %vm329, %v313, 0
      %vm378 = vcmask 1041408
      %v380 = vsel %vm378, %v326, 0
      %382 = vmatprep.subr.bf16.mxu0 0
      %383 = vmatpush1.bf16.msra.mxu0 0
      %384 = vmatprep.subr.bf16.mxu0 0
      %385 = vmatpush1.bf16.msra.mxu0 0
      %386 = vmatprep.subr.bf16.mxu0 0
      %387 = vmatpush1.bf16.msra.mxu0 0
      %388 = vmatprep.subr.bf16.mxu0 0
      %389 = vmatpush1.bf16.msra.mxu0 0
      %390 = vmatprep.subr.bf16.mxu0 0
      %391 = vmatpush1.bf16.msra.mxu0 0
      %392 = vmatprep.subr.bf16.mxu0 0
      %393 = vmatpush1.bf16.msra.mxu0 %v380
      %394 = vmatprep.subr.bf16.mxu0 0
      %395 = vmatpush1.bf16.msra.mxu0 %v325
      %396 = vmatprep.subr.bf16.mxu0 0
      %397 = vmatpush1.bf16.msra.mxu0 %v324
      %398 = vmatprep.subr.bf16.mxu0 0
      %399 = vmatpush2.bf16.msra.mxu0 0
      %400 = vmatprep.subr.bf16.mxu0 0
      %401 = vmatpush2.bf16.msra.mxu0 0
      %402 = vmatprep.subr.bf16.mxu0 0
      %403 = vmatpush2.bf16.msra.mxu0 0
      %404 = vmatprep.subr.bf16.mxu0 0
      %405 = vmatpush2.bf16.msra.mxu0 0
      %406 = vmatprep.subr.bf16.mxu0 0
      %407 = vmatpush2.bf16.msra.mxu0 0
      %408 = vmatprep.subr.bf16.mxu0 0
      %409 = vmatpush2.bf16.msra.mxu0 0
      %410 = vmatprep.subr.bf16.mxu0 0
      %411 = vmatpush2.bf16.msra.mxu0 0
      %412 = vmatprep.subr.bf16.mxu0 0
      %413 = vmatpush2.bf16.msra.mxu0 0
      %414 = vmatprep.mubr.bf16.mxu0 0
      %415 = vmatmul.mubr.bf16.gmra.mxu0 %v331
      %v416 = vpop.f32.mrf.mxu0
      %v417 = vadd.f32 0.0, %v416
      %v418 = vpop.f32.mrf.mxu0
      %v419 = vpop.f32.mrf.mxu0
      %v420 = vadd.f32 0.0, %v419
      %v421 = vpop.f32.mrf.mxu0
      %422 = vmatprep.mubr.bf16.mxu0 0
      %423 = vmatmul.mubr.bf16.gmra.mxu0 %v334
      %v424 = vpop.f32.mrf.mxu0
      %v425 = vadd.f32 0.0, %v424
      %v426 = vpop.f32.mrf.mxu0
      %v427 = vpop.f32.mrf.mxu0
      %v428 = vadd.f32 0.0, %v427
      %v429 = vpop.f32.mrf.mxu0
      %430 = vmatprep.mubr.bf16.mxu0 0
      %431 = vmatmul.mubr.bf16.gmra.mxu0 %v337
      %v432 = vpop.f32.mrf.mxu0
      %v433 = vadd.f32 0.0, %v432
      %v434 = vpop.f32.mrf.mxu0
      %v435 = vpop.f32.mrf.mxu0
      %v436 = vadd.f32 0.0, %v435
      %v437 = vpop.f32.mrf.mxu0
      %438 = vmatprep.mubr.bf16.mxu0 0
      %439 = vmatmul.mubr.bf16.gmra.mxu0 %v340
      %v440 = vpop.f32.mrf.mxu0
      %v441 = vadd.f32 0.0, %v440
      %v442 = vpop.f32.mrf.mxu0
      %v443 = vpop.f32.mrf.mxu0
      %v444 = vadd.f32 0.0, %v443
      %v445 = vpop.f32.mrf.mxu0
      %446 = vmatprep.mubr.bf16.mxu0 0
      %447 = vmatmul.mubr.bf16.gmra.mxu0 %v343
      %v448 = vpop.f32.mrf.mxu0
      %v449 = vadd.f32 0.0, %v448
      %v450 = vpop.f32.mrf.mxu0
      %v451 = vpop.f32.mrf.mxu0
      %v452 = vadd.f32 0.0, %v451
      %v453 = vpop.f32.mrf.mxu0
      %454 = vmatprep.mubr.bf16.mxu0 0
      %455 = vmatmul.mubr.bf16.gmra.mxu0 %v346
      %v456 = vpop.f32.mrf.mxu0
      %v457 = vadd.f32 0.0, %v456
      %v458 = vpop.f32.mrf.mxu0
      %v459 = vpop.f32.mrf.mxu0
      %v460 = vadd.f32 0.0, %v459
      %v461 = vpop.f32.mrf.mxu0
      %462 = vmatprep.mubr.bf16.mxu0 0
      %463 = vmatmul.mubr.bf16.gmra.mxu0 %v349
      %v464 = vpop.f32.mrf.mxu0
      %v465 = vadd.f32 0.0, %v464
      %v466 = vpop.f32.mrf.mxu0
      %v467 = vpop.f32.mrf.mxu0
      %v468 = vadd.f32 0.0, %v467
      %v469 = vpop.f32.mrf.mxu0
      %470 = vmatprep.mubr.bf16.mxu0 0
      %471 = vmatmul.mubr.bf16.gmra.mxu0 %v352
      %v472 = vpop.f32.mrf.mxu0
      %v473 = vadd.f32 0.0, %v472
      %v474 = vpop.f32.mrf.mxu0
      %v475 = vpop.f32.mrf.mxu0
      %v476 = vadd.f32 0.0, %v475
      %v477 = vpop.f32.mrf.mxu0
      %478 = vmatprep.mubr.bf16.mxu0 0
      %479 = vmatmul.mubr.bf16.gmra.mxu0 %v355
      %v480 = vpop.f32.mrf.mxu0
      %v481 = vadd.f32 0.0, %v480
      %v482 = vpop.f32.mrf.mxu0
      %v483 = vpop.f32.mrf.mxu0
      %v484 = vadd.f32 0.0, %v483
      %v485 = vpop.f32.mrf.mxu0
      %486 = vmatprep.mubr.bf16.mxu0 0
      %487 = vmatmul.mubr.bf16.gmra.mxu0 %v358
      %v488 = vpop.f32.mrf.mxu0
      %v489 = vadd.f32 0.0, %v488
      %v490 = vpop.f32.mrf.mxu0
      %v491 = vpop.f32.mrf.mxu0
      %v492 = vadd.f32 0.0, %v491
      %v493 = vpop.f32.mrf.mxu0
      %494 = vmatprep.mubr.bf16.mxu0 0
      %495 = vmatmul.mubr.bf16.gmra.mxu0 %v361
      %v496 = vpop.f32.mrf.mxu0
      %v497 = vadd.f32 0.0, %v496
      %v498 = vpop.f32.mrf.mxu0
      %v499 = vpop.f32.mrf.mxu0
      %v500 = vadd.f32 0.0, %v499
      %v501 = vpop.f32.mrf.mxu0
      %502 = vmatprep.mubr.bf16.mxu0 0
      %503 = vmatmul.mubr.bf16.gmra.mxu0 %v364
      %v504 = vpop.f32.mrf.mxu0
      %v505 = vadd.f32 0.0, %v504
      %v506 = vpop.f32.mrf.mxu0
      %v507 = vpop.f32.mrf.mxu0
      %v508 = vadd.f32 0.0, %v507
      %v509 = vpop.f32.mrf.mxu0
      %510 = vmatprep.mubr.bf16.mxu0 0
      %511 = vmatmul.mubr.bf16.gmra.mxu0 %v367
      %v512 = vpop.f32.mrf.mxu0
      %v513 = vadd.f32 0.0, %v512
      %v514 = vpop.f32.mrf.mxu0
      %v515 = vpop.f32.mrf.mxu0
      %v516 = vadd.f32 0.0, %v515
      %v517 = vpop.f32.mrf.mxu0
      %518 = vmatprep.mubr.bf16.mxu0 0
      %519 = vmatmul.mubr.bf16.gmra.mxu0 %v370
      %v520 = vpop.f32.mrf.mxu0
      %v521 = vadd.f32 0.0, %v520
      %v522 = vpop.f32.mrf.mxu0
      %v523 = vpop.f32.mrf.mxu0
      %v524 = vadd.f32 0.0, %v523
      %v525 = vpop.f32.mrf.mxu0
      %526 = vmatprep.mubr.bf16.mxu0 0
      %527 = vmatmul.mubr.bf16.gmra.mxu0 %v373
      %v528 = vpop.f32.mrf.mxu0
      %v529 = vadd.f32 0.0, %v528
      %v530 = vpop.f32.mrf.mxu0
      %v531 = vpop.f32.mrf.mxu0
      %v532 = vadd.f32 0.0, %v531
      %v533 = vpop.f32.mrf.mxu0
      %534 = vmatprep.mubr.bf16.mxu0 0
      %535 = vmatmul.mubr.bf16.gmra.mxu0 %v376
      %v536 = vpop.f32.mrf.mxu0
      %v537 = vadd.f32 0.0, %v536
      %v538 = vpop.f32.mrf.mxu0
      %v539 = vpop.f32.mrf.mxu0
      %v540 = vadd.f32 0.0, %v539
      %v541 = vpop.f32.mrf.mxu0
      %542 = vdwg.mxu0
      %vm543 = vcmask 64512
      %544 = vst.msk [vmem:[%s194] sm:$0xff] %vm543, %v417
      %545 = vst.msk [vmem:[%s194 + $0x8] sm:$0xff] %vm543, %v420
      %546 = vst.msk [vmem:[%s194 + $0x10] sm:$0xff] %vm543, %v425
      %547 = vst.msk [vmem:[%s194 + $0x18] sm:$0xff] %vm543, %v428
      %548 = vst.msk [vmem:[%s194 + $0x20] sm:$0xff] %vm543, %v433
      %549 = vst.msk [vmem:[%s194 + $0x28] sm:$0xff] %vm543, %v436
      %550 = vst.msk [vmem:[%s194 + $0x30] sm:$0xff] %vm543, %v441
      %551 = vst.msk [vmem:[%s194 + $0x38] sm:$0xff] %vm543, %v444
      %552 = vst.msk [vmem:[%s194 + $0x40] sm:$0xff] %vm543, %v449
      %553 = vst.msk [vmem:[%s194 + $0x48] sm:$0xff] %vm543, %v452
      %554 = vst.msk [vmem:[%s194 + $0x50] sm:$0xff] %vm543, %v457
      %555 = vst.msk [vmem:[%s194 + $0x58] sm:$0xff] %vm543, %v460
      %556 = vst.msk [vmem:[%s194 + $0x60] sm:$0xff] %vm543, %v465
      %557 = vst.msk [vmem:[%s194 + $0x68] sm:$0xff] %vm543, %v468
      %558 = vst.msk [vmem:[%s194 + $0x70] sm:$0xff] %vm543, %v473
      %559 = vst.msk [vmem:[%s194 + $0x78] sm:$0xff] %vm543, %v476
      %560 = vst.msk [vmem:[%s194 + $0x80] sm:$0xff] %vm543, %v481
      %561 = vst.msk [vmem:[%s194 + $0x88] sm:$0xff] %vm543, %v484
      %562 = vst.msk [vmem:[%s194 + $0x90] sm:$0xff] %vm543, %v489
      %563 = vst.msk [vmem:[%s194 + $0x98] sm:$0xff] %vm543, %v492
      %564 = vst.msk [vmem:[%s194 + $0xa0] sm:$0xff] %vm543, %v497
      %565 = vst.msk [vmem:[%s194 + $0xa8] sm:$0xff] %vm543, %v500
      %566 = vst.msk [vmem:[%s194 + $0xb0] sm:$0xff] %vm543, %v505
      %567 = vst.msk [vmem:[%s194 + $0xb8] sm:$0xff] %vm543, %v508
      %568 = vst.msk [vmem:[%s194 + $0xc0] sm:$0xff] %vm543, %v513
      %569 = vst.msk [vmem:[%s194 + $0xc8] sm:$0xff] %vm543, %v516
      %570 = vst.msk [vmem:[%s194 + $0xd0] sm:$0xff] %vm543, %v521
      %571 = vst.msk [vmem:[%s194 + $0xd8] sm:$0xff] %vm543, %v524
      %572 = vst.msk [vmem:[%s194 + $0xe0] sm:$0xff] %vm543, %v529
      %573 = vst.msk [vmem:[%s194 + $0xe8] sm:$0xff] %vm543, %v532
      %574 = vst.msk [vmem:[%s194 + $0xf0] sm:$0xff] %vm543, %v537
      %575 = vst.msk [vmem:[%s194 + $0xf8] sm:$0xff] %vm543, %v540
      %p576 = scmp.eq.s32.totalorder %s16, 0
      // Predicated region
      $region29: #{block_vgg_forward.2} parent=27 // pred_check
        %p577 = pneg %p576
      $region30: #{block_vgg_forward.2} parent=27 // pred_check_branch
        %579 = sbr.rel (%p577) target = $region32
      $region31: #{block_vgg_forward.2} parent=27 // pred_region
        %vm580 = vcmask 57344
        %581 = vst.msk [vmem:[%s3] sm:$0x1] %vm580, 0.0
        %582 = vst.msk [vmem:[%s4] sm:$0x1] %vm580, 0.0
      $region32: #{block_vgg_forward.2} parent=27 // pred_fallthru
        _
      %v583 = vld [vmem:[%s3] sm:$0x1]
      %v584 = vsel %vm543, %v417, 0.0
      %v585 = vsel %vm543, %v420, 0.0
      %v586 = vadd.f32 %v584, %v585
      %v587 = vsel %vm543, %v425, 0.0
      %v588 = vadd.f32 %v586, %v587
      %v589 = vsel %vm543, %v428, 0.0
      %v590 = vadd.f32 %v588, %v589
      %v591 = vsel %vm543, %v433, 0.0
      %v592 = vadd.f32 %v590, %v591
      %v593 = vsel %vm543, %v436, 0.0
      %v594 = vadd.f32 %v592, %v593
      %v595 = vsel %vm543, %v441, 0.0
      %v596 = vadd.f32 %v594, %v595
      %v597 = vsel %vm543, %v444, 0.0
      %v598 = vadd.f32 %v596, %v597
      %v599 = vsel %vm543, %v449, 0.0
      %v600 = vadd.f32 %v598, %v599
      %v601 = vsel %vm543, %v452, 0.0
      %v602 = vadd.f32 %v600, %v601
      %v603 = vsel %vm543, %v457, 0.0
      %v604 = vadd.f32 %v602, %v603
      %v605 = vsel %vm543, %v460, 0.0
      %v606 = vadd.f32 %v604, %v605
      %v607 = vsel %vm543, %v465, 0.0
      %v608 = vadd.f32 %v606, %v607
      %v609 = vsel %vm543, %v468, 0.0
      %v610 = vadd.f32 %v608, %v609
      %v611 = vsel %vm543, %v473, 0.0
      %v612 = vadd.f32 %v610, %v611
      %v613 = vsel %vm543, %v476, 0.0
      %v614 = vadd.f32 %v612, %v613
      %v615 = vsel %vm543, %v481, 0.0
      %v616 = vadd.f32 %v614, %v615
      %v617 = vsel %vm543, %v484, 0.0
      %v618 = vadd.f32 %v616, %v617
      %v619 = vsel %vm543, %v489, 0.0
      %v620 = vadd.f32 %v618, %v619
      %v621 = vsel %vm543, %v492, 0.0
      %v622 = vadd.f32 %v620, %v621
      %v623 = vsel %vm543, %v497, 0.0
      %v624 = vadd.f32 %v622, %v623
      %v625 = vsel %vm543, %v500, 0.0
      %v626 = vadd.f32 %v624, %v625
      %v627 = vsel %vm543, %v505, 0.0
      %v628 = vadd.f32 %v626, %v627
      %v629 = vsel %vm543, %v508, 0.0
      %v630 = vadd.f32 %v628, %v629
      %v631 = vsel %vm543, %v513, 0.0
      %v632 = vadd.f32 %v630, %v631
      %v633 = vsel %vm543, %v516, 0.0
      %v634 = vadd.f32 %v632, %v633
      %v635 = vsel %vm543, %v521, 0.0
      %v636 = vadd.f32 %v634, %v635
      %v637 = vsel %vm543, %v524, 0.0
      %v638 = vadd.f32 %v636, %v637
      %v639 = vsel %vm543, %v529, 0.0
      %v640 = vadd.f32 %v638, %v639
      %v641 = vsel %vm543, %v532, 0.0
      %v642 = vadd.f32 %v640, %v641
      %v643 = vsel %vm543, %v537, 0.0
      %v644 = vadd.f32 %v642, %v643
      %v645 = vsel %vm543, %v540, 0.0
      %v646 = vadd.f32 %v644, %v645
      %v647 = vrot.slane %v646, 4
      %v648 = vadd.f32 %v646, %v647
      %v649 = vrot.slane %v648, 2
      %v650 = vadd.f32 %v648, %v649
      %v651 = vrot.slane %v650, 1
      %v652 = vadd.f32 %v650, %v651
      %v653 = vadd.f32 %v583, %v652
      %vm654 = vcmask 57344
      %655 = vst.msk [vmem:[%s3] sm:$0x1] %vm654, %v653
      %v656 = vld [vmem:[%s4] sm:$0x1]
      %v657 = vmul.f32 %v417, %v417
      %v658 = vmul.f32 %v420, %v420
      %v659 = vmul.f32 %v425, %v425
      %v660 = vmul.f32 %v428, %v428
      %v661 = vmul.f32 %v433, %v433
      %v662 = vmul.f32 %v436, %v436
      %v663 = vmul.f32 %v441, %v441
      %v664 = vmul.f32 %v444, %v444
      %v665 = vmul.f32 %v449, %v449
      %v666 = vmul.f32 %v452, %v452
      %v667 = vmul.f32 %v457, %v457
      %v668 = vmul.f32 %v460, %v460
      %v669 = vmul.f32 %v465, %v465
      %v670 = vmul.f32 %v468, %v468
      %v671 = vmul.f32 %v473, %v473
      %v672 = vmul.f32 %v476, %v476
      %v673 = vmul.f32 %v481, %v481
      %v674 = vmul.f32 %v484, %v484
      %v675 = vmul.f32 %v489, %v489
      %v676 = vmul.f32 %v492, %v492
      %v677 = vmul.f32 %v497, %v497
      %v678 = vmul.f32 %v500, %v500
      %v679 = vmul.f32 %v505, %v505
      %v680 = vmul.f32 %v508, %v508
      %v681 = vmul.f32 %v513, %v513
      %v682 = vmul.f32 %v516, %v516
      %v683 = vmul.f32 %v521, %v521
      %v684 = vmul.f32 %v524, %v524
      %v685 = vmul.f32 %v529, %v529
      %v686 = vmul.f32 %v532, %v532
      %v687 = vmul.f32 %v537, %v537
      %v688 = vmul.f32 %v540, %v540
      %v689 = vsel %vm543, %v657, 0.0
      %v690 = vsel %vm543, %v658, 0.0
      %v691 = vadd.f32 %v689, %v690
      %v692 = vsel %vm543, %v659, 0.0
      %v693 = vadd.f32 %v691, %v692
      %v694 = vsel %vm543, %v660, 0.0
      %v695 = vadd.f32 %v693, %v694
      %v696 = vsel %vm543, %v661, 0.0
      %v697 = vadd.f32 %v695, %v696
      %v698 = vsel %vm543, %v662, 0.0
      %v699 = vadd.f32 %v697, %v698
      %v700 = vsel %vm543, %v663, 0.0
      %v701 = vadd.f32 %v699, %v700
      %v702 = vsel %vm543, %v664, 0.0
      %v703 = vadd.f32 %v701, %v702
      %v704 = vsel %vm543, %v665, 0.0
      %v705 = vadd.f32 %v703, %v704
      %v706 = vsel %vm543, %v666, 0.0
      %v707 = vadd.f32 %v705, %v706
      %v708 = vsel %vm543, %v667, 0.0
      %v709 = vadd.f32 %v707, %v708
      %v710 = vsel %vm543, %v668, 0.0
      %v711 = vadd.f32 %v709, %v710
      %v712 = vsel %vm543, %v669, 0.0
      %v713 = vadd.f32 %v711, %v712
      %v714 = vsel %vm543, %v670, 0.0
      %v715 = vadd.f32 %v713, %v714
      %v716 = vsel %vm543, %v671, 0.0
      %v717 = vadd.f32 %v715, %v716
      %v718 = vsel %vm543, %v672, 0.0
      %v719 = vadd.f32 %v717, %v718
      %v720 = vsel %vm543, %v673, 0.0
      %v721 = vadd.f32 %v719, %v720
      %v722 = vsel %vm543, %v674, 0.0
      %v723 = vadd.f32 %v721, %v722
      %v724 = vsel %vm543, %v675, 0.0
      %v725 = vadd.f32 %v723, %v724
      %v726 = vsel %vm543, %v676, 0.0
      %v727 = vadd.f32 %v725, %v726
      %v728 = vsel %vm543, %v677, 0.0
      %v729 = vadd.f32 %v727, %v728
      %v730 = vsel %vm543, %v678, 0.0
      %v731 = vadd.f32 %v729, %v730
      %v732 = vsel %vm543, %v679, 0.0
      %v733 = vadd.f32 %v731, %v732
      %v734 = vsel %vm543, %v680, 0.0
      %v735 = vadd.f32 %v733, %v734
      %v736 = vsel %vm543, %v681, 0.0
      %v737 = vadd.f32 %v735, %v736
      %v738 = vsel %vm543, %v682, 0.0
      %v739 = vadd.f32 %v737, %v738
      %v740 = vsel %vm543, %v683, 0.0
      %v741 = vadd.f32 %v739, %v740
      %v742 = vsel %vm543, %v684, 0.0
      %v743 = vadd.f32 %v741, %v742
      %v744 = vsel %vm543, %v685, 0.0
      %v745 = vadd.f32 %v743, %v744
      %v746 = vsel %vm543, %v686, 0.0
      %v747 = vadd.f32 %v745, %v746
      %v748 = vsel %vm543, %v687, 0.0
      %v749 = vadd.f32 %v747, %v748
      %v750 = vsel %vm543, %v688, 0.0
      %v751 = vadd.f32 %v749, %v750
      %v752 = vrot.slane %v751, 4
      %v753 = vadd.f32 %v751, %v752
      %v754 = vrot.slane %v753, 2
      %v755 = vadd.f32 %v753, %v754
      %v756 = vrot.slane %v755, 1
      %v757 = vadd.f32 %v755, %v756
      %v758 = vadd.f32 %v656, %v757
      %759 = vst.msk [vmem:[%s4] sm:$0x1] %vm654, %v758
      %s760 = smul.u32 32, %s16
      %p761 = scmp.lt.s32.totalorder %s760, 63
      %s762 = scalar_select %p761, %s760, 63
      %s763 = smul.addr %s762, 8
      %s764 = scalar_lea.vmem %s2, %s763
      // Predicated region
      $region33: #{block_vgg_forward.2} parent=27 // pred_check
        %p765 = pneg %p81
      $region34: #{block_vgg_forward.2} parent=27 // pred_check_branch
        %767 = sbr.rel (%p765) target = $region36
      $region35: #{block_vgg_forward.2} parent=27 // pred_region
        %s768 = smul.u32 32, %s16
      $region36: #{block_vgg_forward.2} parent=27 // pred_fallthru
        _
      // Predicated region
      $region37: #{block_vgg_forward.2} parent=27 // pred_check
        %p769 = pneg %p102
      $region38: #{block_vgg_forward.2} parent=27 // pred_check_branch
        %771 = sbr.rel (%p769) target = $region40
      $region39: #{block_vgg_forward.2} parent=27 // pred_region
        _
      $region40: #{block_vgg_forward.2} parent=27 // pred_fallthru
        _
      // Predicated region
      $region41: #{block_vgg_forward.2} parent=27 // pred_check
        %p772 = pneg %p123
      $region42: #{block_vgg_forward.2} parent=27 // pred_check_branch
        %774 = sbr.rel (%p772) target = $region44
      $region43: #{block_vgg_forward.2} parent=27 // pred_region
        _
      $region44: #{block_vgg_forward.2} parent=27 // pred_fallthru
        _
      // Predicated region
      $region45: #{block_vgg_forward.2} parent=27 // pred_check
        %p775 = pneg %p102
      $region46: #{block_vgg_forward.2} parent=27 // pred_check_branch
        %777 = sbr.rel (%p775) target = $region48
      $region47: #{block_vgg_forward.2} parent=27 // pred_region
        _
      $region48: #{block_vgg_forward.2} parent=27 // pred_fallthru
        _
      // Predicated region
      $region49: #{block_vgg_forward.2} parent=27 // pred_check
        %p778 = pneg %p123
      $region50: #{block_vgg_forward.2} parent=27 // pred_check_branch
        %780 = sbr.rel (%p778) target = $region52
      $region51: #{block_vgg_forward.2} parent=27 // pred_region
        _
      $region52: #{block_vgg_forward.2} parent=27 // pred_fallthru
        _
    $region28: #{block_vgg_forward.2} parent=5 // pred_fallthru
      _
    %p781 = scmp.le.s32.totalorder 2, %s11
    // Predicated region
    $region53: #{block_vgg_forward.2} parent=5 // pred_check
      %p782 = pneg %p781
    $region54: #{block_vgg_forward.2} parent=5 // pred_check_branch
      %784 = sbr.rel (%p782) target = $region56
    $region55: #{block_vgg_forward.2} parent=5 // pred_region
      %s785 = ssub.s32 %s11, 2
      // Predicated region
      $region57: #{block_vgg_forward.2} parent=55 // pred_check
        %p786 = pneg %p87
      $region58: #{block_vgg_forward.2} parent=55 // pred_check_branch
        %788 = sbr.rel (%p786) target = $region60
      $region59: #{block_vgg_forward.2} parent=55 // pred_region
        %s789 = smul.u32 32, %s17
        %p790 = scmp.lt.s32.totalorder %s789, 63
        %s791 = scalar_select %p790, %s789, 63
        %s792 = smul.addr %s791, 8
        %s793 = scalar_lea.vmem %s2, %s792
      $region60: #{block_vgg_forward.2} parent=55 // pred_fallthru
        _
    $region56: #{block_vgg_forward.2} parent=5 // pred_fallthru
      _
  $region6: #{block_vgg_forward.2} parent=0 // loop_footer
    %s15 = sadd.s32 1, %s11
  $region7: #{block_vgg_forward.2} parent=0 // loop_footer_branch
    %10 = sbr.rel target = $region3
  $region8: #{block_vgg_forward.2} parent=0 // loop_exit
    _

</llo_original>
